<compile_context>
chip_gen: v5e
topology: v5e:2x2
jax: 0.10.0
libtpu: 0.0.40
codegen_flags: <defaults>
</compile_context>

<pallas_src>
import functools

import jax
import jax.numpy as jnp
from jax.experimental import pallas as pl
from jax.experimental.pallas import tpu as pltpu

BN_EPS = 1e-5  # PyTorch BatchNorm1d default

# VMEM budgeting (generation-aware): v7x has 64 MiB physical VMEM (32 MiB default scoped),
# v5e only 16 MiB default scoped. We raise the scoped limit to 48 MiB and keep the
# double-buffered tile footprint + resident weights under ~32 MiB.
_VMEM_LIMIT_BYTES = 48 * 1024 * 1024
_VMEM_TILE_BUDGET = 32 * 1024 * 1024


def _round_up(v, m):
    return ((v + m - 1) // m) * m


def _pick_time_tile(m_out, kc_pad, c_out_pad, x_bytes, res_bytes, out_bytes):
    """Largest power-of-two time tile (>=8, target 512 rows) fitting the VMEM budget."""
    resident = kc_pad * c_out_pad * 2 + 2 * c_out_pad * 4          # bf16 weights + f32 scale/bias
    per_row = 2 * (kc_pad * x_bytes + c_out_pad * res_bytes + c_out_pad * out_bytes)  # 2x = dbl buf
    tm = 512                                                       # ~85% HBM roofline needs >=512 rows
    while tm > 8 and resident + tm * per_row > _VMEM_TILE_BUDGET:
        tm //= 2
    tm = min(tm, _round_up(m_out, 8))
    return max(tm, 8)


def _residual_kernel(xcol_ref, res_ref, w_ref, scale_ref, bias_ref, o_ref):
    """One (batch, time-tile): fused im2col conv matmul + folded BN + residual add.

    xcol_ref : [1, TM, KC_pad]      bf16  (im2col rows)
    res_ref  : [1, TM, C_out_pad]   residual from previous block
    w_ref    : [KC_pad, C_out_pad]  bf16  (resident in VMEM)
    scale_ref, bias_ref : [1, C_out_pad] f32 (folded BN + conv bias, resident)
    o_ref    : [1, TM, C_out_pad]
    """
    acc = jnp.dot(xcol_ref[0], w_ref[...], preferred_element_type=jnp.float32)  # MXU, f32 acc
    y = acc * scale_ref[...] + bias_ref[...]                                    # folded BN (+bias)
    y = y + res_ref[0].astype(jnp.float32)                                      # residual add
    o_ref[0] = y.astype(o_ref.dtype)


@functools.partial(jax.jit, static_argnames=("stride",))
def contextnet_residual(x, out, conv_w, conv_b, bn_gamma, bn_beta, bn_mean, bn_var, *, stride=1):
    """ContextNetResidual forward (inference mode).

    x:      [B, C_in, M]
    out:    [B, C_out, M_out]   residual from the previous block
    conv_w: [C_out, C_in, K]    PyTorch Conv1d weight layout
    conv_b, bn_*: [C_out]
    returns [B, C_out, M_out]
    """
    B, C_in, M = x.shape
    C_out, C_in_w, K = conv_w.shape
    assert C_in_w == C_in

    if stride == 1:                       # PyTorch padding='same'
        total_pad = K - 1
        pad_left = total_pad // 2
        pad_right = total_pad - pad_left
    else:                                 # PyTorch padding=0 when stride != 1
        pad_left = pad_right = 0
    m_pad = M + pad_left + pad_right
    m_out = (m_pad - K) // stride + 1
    assert out.shape == (B, C_out, m_out)

    # --- fold eval-mode BatchNorm and conv bias into per-channel scale/shift (hoisted, f32) ---
    scale = (bn_gamma / jnp.sqrt(bn_var + BN_EPS)).astype(jnp.float32)     # [C_out]
    bias = ((conv_b - bn_mean) * scale + bn_beta).astype(jnp.float32)      # [C_out]

    # --- lane-dense channel padding ---
    KC = K * C_in
    KC_pad = _round_up(KC, 128)
    C_out_pad = _round_up(C_out, 128)

    # --- channels-last, zero-pad time, wrapper-side im2col (strided tap gather), bf16 cast ---
    # TODO(synk): channels-last end-to-end + producer-side im2col (or an in-kernel halo DMA)
    # would remove these HBM round trips.
    x_t = jnp.transpose(x, (0, 2, 1))                                      # [B, M, C_in]
    x_t = jnp.pad(x_t, ((0, 0), (pad_left, pad_right), (0, 0)))            # [B, m_pad, C_in]
    span = (m_out - 1) * stride + 1
    cols = [x_t[:, k:k + span:stride, :] for k in range(K)]                # K x [B, m_out, C_in]
    x_col = jnp.concatenate(cols, axis=-1).astype(jnp.bfloat16)            # [B, m_out, K*C_in]

    res_t = jnp.transpose(out, (0, 2, 1))                                  # [B, m_out, C_out]

    # --- time-tile size under the VMEM budget ---
    TM = _pick_time_tile(
        m_out, KC_pad, C_out_pad,
        x_bytes=2, res_bytes=res_t.dtype.itemsize, out_bytes=jnp.dtype(x.dtype).itemsize)
    m_out_pad = _round_up(m_out, TM)

    x_col = jnp.pad(x_col, ((0, 0), (0, m_out_pad - m_out), (0, KC_pad - KC)))
    res_p = jnp.pad(res_t, ((0, 0), (0, m_out_pad - m_out), (0, C_out_pad - C_out)))

    # conv weight -> im2col layout [K*C_in, C_out], bf16, lane-padded
    w_col = jnp.transpose(conv_w, (2, 1, 0)).reshape(KC, C_out).astype(jnp.bfloat16)
    w_col = jnp.pad(w_col, ((0, KC_pad - KC), (0, C_out_pad - C_out)))     # [KC_pad, C_out_pad]

    scale_p = jnp.pad(scale, (0, C_out_pad - C_out)).reshape(1, C_out_pad)
    bias_p = jnp.pad(bias, (0, C_out_pad - C_out)).reshape(1, C_out_pad)

    grid = (B, m_out_pad // TM)

    y_p = pl.pallas_call(
        _residual_kernel,
        out_shape=jax.ShapeDtypeStruct((B, m_out_pad, C_out_pad), x.dtype),
        grid_spec=pltpu.PrefetchScalarGridSpec(
            num_scalar_prefetch=0,
            grid=grid,
            in_specs=[
                pl.BlockSpec((1, TM, KC_pad), lambda b, t: (b, t, 0)),        # im2col tile
                pl.BlockSpec((1, TM, C_out_pad), lambda b, t: (b, t, 0)),     # residual tile
                pl.BlockSpec(memory_space=pltpu.MemorySpace.VMEM),            # conv weights (resident)
                pl.BlockSpec(memory_space=pltpu.MemorySpace.VMEM),            # folded BN scale
                pl.BlockSpec(memory_space=pltpu.MemorySpace.VMEM),            # folded BN shift
            ],
            out_specs=pl.BlockSpec((1, TM, C_out_pad), lambda b, t: (b, t, 0)),
        ),
        compiler_params=pltpu.CompilerParams(
            dimension_semantics=("parallel", "parallel"),
            vmem_limit_bytes=_VMEM_LIMIT_BYTES,
        ),
    )(x_col, res_p, w_col, scale_p, bias_p)

    y = y_p[:, :m_out, :C_out]                                             # drop lane/time padding
    return jnp.transpose(y, (0, 2, 1))                                     # [B, C_out, M_out]


def _reference(x, out, conv_w, conv_b, bn_gamma, bn_beta, bn_mean, bn_var, stride):
    """Pure-JAX reference matching the PyTorch module in eval mode.

    x / conv_w are quantized to bf16 (same as the kernel's MXU operands) so the comparison
    isolates kernel/layout bugs rather than bf16 rounding.
    """
    _, _, K = conv_w.shape
    if stride == 1:
        total_pad = K - 1
        pad = (total_pad // 2, total_pad - total_pad // 2)
    else:
        pad = (0, 0)
    xq = x.astype(jnp.bfloat16).astype(jnp.float32)
    wq = conv_w.astype(jnp.bfloat16).astype(jnp.float32)
    y = jax.lax.conv_general_dilated(
        xq, wq, window_strides=(stride,), padding=[pad],
        dimension_numbers=("NCH", "OIH", "NCH"),
        precision=jax.lax.Precision.HIGHEST)
    y = y + conv_b[None, :, None]
    y = (y - bn_mean[None, :, None]) * jax.lax.rsqrt(bn_var[None, :, None] + BN_EPS)
    y = y * bn_gamma[None, :, None] + bn_beta[None, :, None]
    return y + out


if __name__ == "__main__":
    key = jax.random.PRNGKey(0)

    def make_case(case_key, B, C_in, C_out, M, K, stride):
        ks = jax.random.split(case_key, 8)
        x = jax.random.normal(ks[0], (B, C_in, M), jnp.float32)
        w = jax.random.normal(ks[1], (C_out, C_in, K), jnp.float32) / jnp.sqrt(C_in * K)
        b = 0.1 * jax.random.normal(ks[2], (C_out,), jnp.float32)
        gamma = 1.0 + 0.1 * jax.random.normal(ks[3], (C_out,), jnp.float32)
        beta = 0.1 * jax.random.normal(ks[4], (C_out,), jnp.float32)
        mean = 0.1 * jax.random.normal(ks[5], (C_out,), jnp.float32)
        var = jnp.abs(1.0 + 0.1 * jax.random.normal(ks[6], (C_out,), jnp.float32))
        m_out = M if stride == 1 else (M - K) // stride + 1
        res = jax.random.normal(ks[7], (B, C_out, m_out), jnp.float32)
        return (x, res, w, b, gamma, beta, mean, var)

    k1, k2 = jax.random.split(key)

    # Kernel and reference both use bf16 conv operands with f32 accumulation; residual/BN in f32.
    TOL = dict(atol=2e-2, rtol=2e-2)

    # Case 1: stride=1, padding='same'   (B=2, C_in=32, C_out=64, M=16, K=5)
    args1 = make_case(k1, B=2, C_in=32, C_out=64, M=16, K=5, stride=1)
    y1 = jax.block_until_ready(contextnet_residual(*args1, stride=1))
    ref1 = _reference(*args1, stride=1)
    assert y1.shape == ref1.shape
    assert jnp.allclose(y1, ref1, **TOL), "stride=1 mismatch vs reference"

    # Case 2: stride=2, no padding       (B=2, C_in=32, C_out=32, M=16, K=3)
    args2 = make_case(k2, B=2, C_in=32, C_out=32, M=16, K=3, stride=2)
    y2 = jax.block_until_ready(contextnet_residual(*args2, stride=2))
    ref2 = _reference(*args2, stride=2)
    assert y2.shape == ref2.shape
    assert jnp.allclose(y2, ref2, **TOL), "stride=2 mismatch vs reference"

    print("KERNEL_OK")
</pallas_src>

<mosaic_0001>
module attributes {stable_mosaic.version = 11 : i64} {
  func.func @_residual_kernel(%arg0: i32, %arg1: i32, %arg2: memref<1x16x256xbf16, #tpu.memory_space<vmem>>, %arg3: memref<1x16x128xf32, #tpu.memory_space<vmem>>, %arg4: memref<256x128xbf16, #tpu.memory_space<vmem>>, %arg5: memref<1x128xf32, #tpu.memory_space<vmem>>, %arg6: memref<1x128xf32, #tpu.memory_space<vmem>>, %arg7: memref<1x16x128xf32, #tpu.memory_space<vmem>>) attributes {dimension_semantics = [#tpu.dimension_semantics<parallel>, #tpu.dimension_semantics<parallel>], iteration_bounds = array<i64: 2, 1>, scalar_prefetch = 0 : i64, scratch_operands = 0 : i64, tpu.core_type = #tpu.core_type<tc>, window_params = [{transform_indices = @transform_0, window_bounds = array<i64: 1, 16, 256>}, {transform_indices = @transform_1, window_bounds = array<i64: 1, 16, 128>}, {pipeline_mode = #tpu.pipeline_mode<synchronous>, transform_indices = @transform_2, window_bounds = array<i64: 256, 128>}, {pipeline_mode = #tpu.pipeline_mode<synchronous>, transform_indices = @transform_3, window_bounds = array<i64: 1, 128>}, {pipeline_mode = #tpu.pipeline_mode<synchronous>, transform_indices = @transform_4, window_bounds = array<i64: 1, 128>}, {transform_indices = @transform_5, window_bounds = array<i64: 1, 16, 128>}]} {
    %c0 = arith.constant 0 : index
    %c0_0 = arith.constant 0 : index
    %c0_1 = arith.constant 0 : index
    %0 = vector.load %arg2[%c0, %c0_0, %c0_1] : memref<1x16x256xbf16, #tpu.memory_space<vmem>>, vector<1x16x256xbf16>
    %1 = vector.shape_cast %0 : vector<1x16x256xbf16> to vector<16x256xbf16>
    %c0_2 = arith.constant 0 : index
    %c0_3 = arith.constant 0 : index
    %2 = vector.load %arg4[%c0_2, %c0_3] : memref<256x128xbf16, #tpu.memory_space<vmem>>, vector<256x128xbf16>
    %cst = arith.constant dense<0.000000e+00> : vector<16x128xf32>
    %3 = tpu.matmul %1, %2, %cst {dimension_numbers = #tpu.dot_dimension_numbers<[1], [0], [0], [1], [0, 0, 1, 1], [], []>} : vector<16x256xbf16>, vector<256x128xbf16>, vector<16x128xf32> -> vector<16x128xf32>
    %c0_4 = arith.constant 0 : index
    %c0_5 = arith.constant 0 : index
    %4 = vector.load %arg5[%c0_4, %c0_5] : memref<1x128xf32, #tpu.memory_space<vmem>>, vector<1x128xf32>
    %5 = vector.broadcast %4 : vector<1x128xf32> to vector<16x128xf32>
    %6 = arith.mulf %3, %5 : vector<16x128xf32>
    %c0_6 = arith.constant 0 : index
    %c0_7 = arith.constant 0 : index
    %7 = vector.load %arg6[%c0_6, %c0_7] : memref<1x128xf32, #tpu.memory_space<vmem>>, vector<1x128xf32>
    %8 = vector.broadcast %7 : vector<1x128xf32> to vector<16x128xf32>
    %9 = arith.addf %6, %8 : vector<16x128xf32>
    %c0_8 = arith.constant 0 : index
    %c0_9 = arith.constant 0 : index
    %c0_10 = arith.constant 0 : index
    %10 = vector.load %arg3[%c0_8, %c0_9, %c0_10] : memref<1x16x128xf32, #tpu.memory_space<vmem>>, vector<1x16x128xf32>
    %11 = vector.shape_cast %10 : vector<1x16x128xf32> to vector<16x128xf32>
    %12 = arith.addf %9, %11 : vector<16x128xf32>
    %c0_11 = arith.constant 0 : index
    %c0_12 = arith.constant 0 : index
    %c0_13 = arith.constant 0 : index
    %13 = vector.load %arg7[%c0_11, %c0_12, %c0_13] : memref<1x16x128xf32, #tpu.memory_space<vmem>>, vector<1x16x128xf32>
    %14 = vector.shape_cast %13 : vector<1x16x128xf32> to vector<16x128xf32>
    %15 = vector.shape_cast %12 : vector<16x128xf32> to vector<1x16x128xf32>
    tpu.vector_store %arg7[%c0_11, %c0_12, %c0_13], %15 {strides = array<i32>} : memref<1x16x128xf32, #tpu.memory_space<vmem>>, vector<1x16x128xf32>,
    return
  }
  func.func @transform_0(%arg0: i32, %arg1: i32) -> (i32, i32, i32) {
    %c0_i32 = arith.constant 0 : i32
    %c0_i32_0 = arith.constant 0 : i32
    return %arg0, %arg1, %c0_i32 : i32, i32, i32
  }
  func.func @transform_1(%arg0: i32, %arg1: i32) -> (i32, i32, i32) {
    %c0_i32 = arith.constant 0 : i32
    %c0_i32_0 = arith.constant 0 : i32
    return %arg0, %arg1, %c0_i32 : i32, i32, i32
  }
  func.func @transform_2(%arg0: i32, %arg1: i32) -> (i32, i32) {
    %c0_i32 = arith.constant 0 : i32
    %c0_i32_0 = arith.constant 0 : i32
    %c0_i32_1 = arith.constant 0 : i32
    return %c0_i32, %c0_i32_0 : i32, i32
  }
  func.func @transform_3(%arg0: i32, %arg1: i32) -> (i32, i32) {
    %c0_i32 = arith.constant 0 : i32
    %c0_i32_0 = arith.constant 0 : i32
    %c0_i32_1 = arith.constant 0 : i32
    return %c0_i32, %c0_i32_0 : i32, i32
  }
  func.func @transform_4(%arg0: i32, %arg1: i32) -> (i32, i32) {
    %c0_i32 = arith.constant 0 : i32
    %c0_i32_0 = arith.constant 0 : i32
    %c0_i32_1 = arith.constant 0 : i32
    return %c0_i32, %c0_i32_0 : i32, i32
  }
  func.func @transform_5(%arg0: i32, %arg1: i32) -> (i32, i32, i32) {
    %c0_i32 = arith.constant 0 : i32
    %c0_i32_0 = arith.constant 0 : i32
    return %arg0, %arg1, %c0_i32 : i32, i32, i32
  }
}

</mosaic_0001>

<llo_original>
// kernel: contextnet_residual.1
$region0: #{contextnet_residual.1}
  #allocation0 [shape = 'u32[]', space=smem, size = 0x4, offset = 0x4, fixed_abs, tag = 'smem constant byte address 0x4 - core index']
  #allocation1 [shape = 'u32[72,128]{1,0:T(1,128)}', space=vmem, size = 0x9000, scoped, tag = 'internal scratch']
  %s0 = inlined_call_operand.vmem [shape: bf16[2,16,256], index: 0, kind: input, shape index: {}]
  %s1 = inlined_call_operand.vmem [shape: f32[2,16,128], index: 1, kind: input, shape index: {}]
  %s2 = inlined_call_operand.vmem [shape: bf16[256,128], index: 2, kind: input, shape index: {}]
  %s3 = inlined_call_operand.vmem [shape: f32[1,128], index: 3, kind: input, shape index: {}]
  %s4 = inlined_call_operand.vmem [shape: f32[1,128], index: 4, kind: input, shape index: {}]
  %s5 = inlined_call_operand.vmem [shape: f32[2,16,128], index: 5, kind: output, shape index: {}]
  %s6 = sld [smem:[#allocation0]]
  $region53: #{contextnet_residual.1} parent=0
    _
  %s8 = ssub.s32 1, %s6
  %s9 = scalar_select 0, %s8, %s6
  loop: start=0, step=1, limit=4
  $region2: #{contextnet_residual.1} parent=0 // loop_pre_header
    _
  $region3: #{contextnet_residual.1} parent=0 // loop_header
    %s11 = sphi 0, %s15
    %p12 = scmp.ge.s32.totalorder %s11, 4
    %s18 = sphi 0, %s30
    %s19 = sphi 0, %s26
    %s20 = sphi 0, %s18
    %s21 = sphi 0, %s19
    %s22 = sphi 0, %s20
    %s23 = sphi 0, %s21
    %s35 = sphi 0, %s37
    %s38 = sphi 0, %s35
    %s39 = sphi 0, %s38
    %s55 = sphi 0, %s39
    %s63 = sphi 0, %s65
    %s66 = sphi 0, %s63
    %s67 = sphi 0, %s66
    %s83 = sphi 0, %s67
    %s87 = sphi 0, %s87
    %s89 = sphi 0, %s87
    %s90 = sphi 0, %s89
    %s104 = sphi 0, %s90
    %s108 = sphi 0, %s108
    %s110 = sphi 0, %s108
    %s111 = sphi 0, %s110
    %s125 = sphi 0, %s111
    %s129 = sphi 0, %s129
    %s131 = sphi 0, %s129
    %s132 = sphi 0, %s131
    %s146 = sphi 0, %s132
    %s154 = sphi 0, %s156
    %s157 = sphi 0, %s154
    %s158 = sphi 0, %s157
    %s174 = sphi 0, %s158
  $region4: #{contextnet_residual.1} parent=0 // loop_header_branch
    %14 = sbr.rel (%p12) target = $region8
  $region5: #{contextnet_residual.1} parent=0 // loop_body
    %s16 = ssub.s32 %s11, 1
    %s17 = ssub.s32 %s11, 2
    %s24 = sadd.s32 1, %s19
    %p25 = scmp.ge.s32.totalorder %s24, 1
    %s26 = scalar_select %p25, 0, %s24
    %s27 = sadd.s32 1, %s18
    %s28 = scalar_select %p25, %s27, %s18
    %p29 = scmp.ge.s32.totalorder %s28, 2
    %s30 = scalar_select %p29, 0, %s28
    %s31 = ssub.s32 %s18, %s30
    %s32 = ssub.s32 %s19, %s26
    %s33 = sor.u32 %s31, %s32
    %p34 = scmp.eq.s32.totalorder %s33, 0
    %s36 = sadd.s32 %s35, 1
    %s37 = scalar_select %p34, %s35, %s36
    %p40 = pneg %p34
    %p41 = scmp.eq.s32.totalorder %s11, 1
    %p42 = por %p40, %p41
    %p43 = scmp.ne.s32.totalorder %s35, %s38
    %p44 = scmp.eq.s32.totalorder %s11, 0
    %p45 = por %p43, %p44
    %p46 = scmp.ne.s32.totalorder %s35, %s38
    %p47 = scmp.eq.s32.totalorder %s16, 1
    %p48 = por %p46, %p47
    %p49 = scmp.ne.s32.totalorder %s38, %s39
    %p50 = scmp.eq.s32.totalorder %s16, 0
    %p51 = por %p49, %p50
    %p52 = scmp.ne.s32.totalorder %s38, %s39
    %p53 = scmp.eq.s32.totalorder %s17, 1
    %p54 = por %p52, %p53
    %p56 = scmp.ne.s32.totalorder %s39, %s55
    %p57 = scmp.eq.s32.totalorder %s17, 0
    %p58 = por %p56, %p57
    %s59 = ssub.s32 %s18, %s30
    %s60 = ssub.s32 %s19, %s26
    %s61 = sor.u32 %s59, %s60
    %p62 = scmp.eq.s32.totalorder %s61, 0
    %s64 = sadd.s32 %s63, 1
    %s65 = scalar_select %p62, %s63, %s64
    %p68 = pneg %p62
    %p69 = scmp.eq.s32.totalorder %s11, 1
    %p70 = por %p68, %p69
    %p71 = scmp.ne.s32.totalorder %s63, %s66
    %p72 = scmp.eq.s32.totalorder %s11, 0
    %p73 = por %p71, %p72
    %p74 = scmp.ne.s32.totalorder %s63, %s66
    %p75 = scmp.eq.s32.totalorder %s16, 1
    %p76 = por %p74, %p75
    %p77 = scmp.ne.s32.totalorder %s66, %s67
    %p78 = scmp.eq.s32.totalorder %s16, 0
    %p79 = por %p77, %p78
    %p80 = scmp.ne.s32.totalorder %s66, %s67
    %p81 = scmp.eq.s32.totalorder %s17, 1
    %p82 = por %p80, %p81
    %p84 = scmp.ne.s32.totalorder %s67, %s83
    %p85 = scmp.eq.s32.totalorder %s17, 0
    %p86 = por %p84, %p85
    %s88 = sadd.s32 %s87, 1
    %p91 = scmp.eq.s32.totalorder %s11, 1
    %p92 = scmp.ne.s32.totalorder %s87, %s89
    %p93 = scmp.eq.s32.totalorder %s11, 0
    %p94 = por %p92, %p93
    %p95 = scmp.ne.s32.totalorder %s87, %s89
    %p96 = scmp.eq.s32.totalorder %s16, 1
    %p97 = por %p95, %p96
    %p98 = scmp.ne.s32.totalorder %s89, %s90
    %p99 = scmp.eq.s32.totalorder %s16, 0
    %p100 = por %p98, %p99
    %p101 = scmp.ne.s32.totalorder %s89, %s90
    %p102 = scmp.eq.s32.totalorder %s17, 1
    %p103 = por %p101, %p102
    %p105 = scmp.ne.s32.totalorder %s90, %s104
    %p106 = scmp.eq.s32.totalorder %s17, 0
    %p107 = por %p105, %p106
    %s109 = sadd.s32 %s108, 1
    %p112 = scmp.eq.s32.totalorder %s11, 1
    %p113 = scmp.ne.s32.totalorder %s108, %s110
    %p114 = scmp.eq.s32.totalorder %s11, 0
    %p115 = por %p113, %p114
    %p116 = scmp.ne.s32.totalorder %s108, %s110
    %p117 = scmp.eq.s32.totalorder %s16, 1
    %p118 = por %p116, %p117
    %p119 = scmp.ne.s32.totalorder %s110, %s111
    %p120 = scmp.eq.s32.totalorder %s16, 0
    %p121 = por %p119, %p120
    %p122 = scmp.ne.s32.totalorder %s110, %s111
    %p123 = scmp.eq.s32.totalorder %s17, 1
    %p124 = por %p122, %p123
    %p126 = scmp.ne.s32.totalorder %s111, %s125
    %p127 = scmp.eq.s32.totalorder %s17, 0
    %p128 = por %p126, %p127
    %s130 = sadd.s32 %s129, 1
    %p133 = scmp.eq.s32.totalorder %s11, 1
    %p134 = scmp.ne.s32.totalorder %s129, %s131
    %p135 = scmp.eq.s32.totalorder %s11, 0
    %p136 = por %p134, %p135
    %p137 = scmp.ne.s32.totalorder %s129, %s131
    %p138 = scmp.eq.s32.totalorder %s16, 1
    %p139 = por %p137, %p138
    %p140 = scmp.ne.s32.totalorder %s131, %s132
    %p141 = scmp.eq.s32.totalorder %s16, 0
    %p142 = por %p140, %p141
    %p143 = scmp.ne.s32.totalorder %s131, %s132
    %p144 = scmp.eq.s32.totalorder %s17, 1
    %p145 = por %p143, %p144
    %p147 = scmp.ne.s32.totalorder %s132, %s146
    %p148 = scmp.eq.s32.totalorder %s17, 0
    %p149 = por %p147, %p148
    %s150 = ssub.s32 %s18, %s30
    %s151 = ssub.s32 %s19, %s26
    %s152 = sor.u32 %s150, %s151
    %p153 = scmp.eq.s32.totalorder %s152, 0
    %s155 = sadd.s32 %s154, 1
    %s156 = scalar_select %p153, %s154, %s155
    %p159 = pneg %p153
    %p160 = scmp.eq.s32.totalorder %s11, 1
    %p161 = por %p159, %p160
    %p162 = scmp.ne.s32.totalorder %s154, %s157
    %p163 = scmp.eq.s32.totalorder %s11, 0
    %p164 = por %p162, %p163
    %p165 = scmp.ne.s32.totalorder %s154, %s157
    %p166 = scmp.eq.s32.totalorder %s16, 1
    %p167 = por %p165, %p166
    %p168 = scmp.ne.s32.totalorder %s157, %s158
    %p169 = scmp.eq.s32.totalorder %s16, 0
    %p170 = por %p168, %p169
    %p171 = scmp.ne.s32.totalorder %s157, %s158
    %p172 = scmp.eq.s32.totalorder %s17, 1
    %p173 = por %p171, %p172
    %p175 = scmp.ne.s32.totalorder %s158, %s174
    %p176 = scmp.eq.s32.totalorder %s17, 0
    %p177 = por %p175, %p176
    %p178 = scmp.le.s32.totalorder 1, %s11
    %p179 = scmp.lt.s32.totalorder %s11, 3
    %p180 = pnand %p178, %p179
    %p181 = pneg %p180
    // Predicated region
    $region9: #{contextnet_residual.1} parent=5 // pred_check
      _
    $region10: #{contextnet_residual.1} parent=5 // pred_check_branch
      %183 = sbr.rel (%p180) target = $region12
    $region11: #{contextnet_residual.1} parent=5 // pred_region
      %s184 = ssub.s32 %s11, 1
      // Predicated region
      $region13: #{contextnet_residual.1} parent=11 // pred_check
        %p185 = pneg %p100
      $region14: #{contextnet_residual.1} parent=11 // pred_check_branch
        %187 = sbr.rel (%p185) target = $region16
      $region15: #{contextnet_residual.1} parent=11 // pred_region
        _
      $region16: #{contextnet_residual.1} parent=11 // pred_fallthru
        _
      // Predicated region
      $region17: #{contextnet_residual.1} parent=11 // pred_check
        %p188 = pneg %p121
      $region18: #{contextnet_residual.1} parent=11 // pred_check_branch
        %190 = sbr.rel (%p188) target = $region20
      $region19: #{contextnet_residual.1} parent=11 // pred_region
        _
      $region20: #{contextnet_residual.1} parent=11 // pred_fallthru
        _
      // Predicated region
      $region21: #{contextnet_residual.1} parent=11 // pred_check
        %p191 = pneg %p142
      $region22: #{contextnet_residual.1} parent=11 // pred_check_branch
        %193 = sbr.rel (%p191) target = $region24
      $region23: #{contextnet_residual.1} parent=11 // pred_region
        _
      $region24: #{contextnet_residual.1} parent=11 // pred_fallthru
        _
    $region12: #{contextnet_residual.1} parent=5 // pred_fallthru
      _
    %p194 = scmp.lt.s32.totalorder %s11, 2
    // Predicated region
    $region25: #{contextnet_residual.1} parent=5 // pred_check
      %p195 = pneg %p194
    $region26: #{contextnet_residual.1} parent=5 // pred_check_branch
      %197 = sbr.rel (%p195) target = $region28
    $region27: #{contextnet_residual.1} parent=5 // pred_region
      // Predicated region
      $region29: #{contextnet_residual.1} parent=27 // pred_check
        %p198 = pneg %p45
      $region30: #{contextnet_residual.1} parent=27 // pred_check_branch
        %200 = sbr.rel (%p198) target = $region32
      $region31: #{contextnet_residual.1} parent=27 // pred_region
        %s201 = smul.u32 2, %s19
        %p202 = scmp.lt.s32.totalorder %s18, 1
        %s203 = scalar_select %p202, %s18, 1
        %p204 = scmp.lt.s32.totalorder %s201, 1
        %s205 = scalar_select %p204, %s201, 1
        %s206 = smul.addr %s205, 2
        %s207 = smul.addr %s203, 4
        %s208 = sadd.s32 %s206, %s207
        %s209 = smul.addr %s208, 4
        %s210 = scalar_lea.vmem %s0, %s209
        %s211 = smul.u32 2, %s19
      $region32: #{contextnet_residual.1} parent=27 // pred_fallthru
        _
      // Predicated region
      $region33: #{contextnet_residual.1} parent=27 // pred_check
        %p212 = pneg %p73
      $region34: #{contextnet_residual.1} parent=27 // pred_check_branch
        %214 = sbr.rel (%p212) target = $region36
      $region35: #{contextnet_residual.1} parent=27 // pred_region
        %s215 = smul.u32 2, %s19
        %p216 = scmp.lt.s32.totalorder %s18, 1
        %s217 = scalar_select %p216, %s18, 1
        %p218 = scmp.lt.s32.totalorder %s215, 1
        %s219 = scalar_select %p218, %s215, 1
        %s220 = smul.addr %s217, 2
        %s221 = sadd.s32 %s219, %s220
        %s222 = smul.addr %s221, 8
        %s223 = scalar_lea.vmem %s1, %s222
        %s224 = smul.u32 2, %s19
      $region36: #{contextnet_residual.1} parent=27 // pred_fallthru
        _
    $region28: #{contextnet_residual.1} parent=5 // pred_fallthru
      _
    %p225 = scmp.le.s32.totalorder 1, %s11
    %p226 = scmp.lt.s32.totalorder %s11, 3
    %p227 = pnand %p225, %p226
    %p228 = pneg %p227
    // Predicated region
    $region37: #{contextnet_residual.1} parent=5 // pred_check
      _
    $region38: #{contextnet_residual.1} parent=5 // pred_check_branch
      %230 = sbr.rel (%p227) target = $region40
    $region39: #{contextnet_residual.1} parent=5 // pred_region
      %s231 = ssub.s32 %s11, 1
      %s232 = smul.u32 2, %s21
      %p233 = scmp.lt.s32.totalorder %s20, 1
      %s234 = scalar_select %p233, %s20, 1
      %p235 = scmp.lt.s32.totalorder %s232, 1
      %s236 = scalar_select %p235, %s232, 1
      %s237 = smul.addr %s236, 2
      %s238 = smul.addr %s234, 4
      %s239 = sadd.s32 %s237, %s238
      %s240 = smul.addr %s239, 4
      %s241 = scalar_lea.vmem %s0, %s240
      %p242 = pneg %p51
      %p243 = pneg %p48
      %s244 = smul.u32 2, %s21
      %p245 = scmp.lt.s32.totalorder %s20, 1
      %s246 = scalar_select %p245, %s20, 1
      %p247 = scmp.lt.s32.totalorder %s244, 1
      %s248 = scalar_select %p247, %s244, 1
      %s249 = smul.addr %s246, 2
      %s250 = sadd.s32 %s248, %s249
      %s251 = smul.addr %s250, 8
      %s252 = scalar_lea.vmem %s1, %s251
      %p253 = pneg %p79
      %p254 = pneg %p76
      %p255 = pneg %p100
      %p256 = pneg %p97
      %p257 = pneg %p121
      %p258 = pneg %p118
      %p259 = pneg %p142
      %p260 = pneg %p139
      %p261 = pneg %p170
      %p262 = pneg %p167
      %s263 = smul.u32 2, %s21
      %p264 = scmp.lt.s32.totalorder %s20, 1
      %s265 = scalar_select %p264, %s20, 1
      %p266 = scmp.lt.s32.totalorder %s263, 1
      %s267 = scalar_select %p266, %s263, 1
      %s268 = smul.addr %s265, 2
      %s269 = sadd.s32 %s267, %s268
      %s270 = smul.addr %s269, 8
      %s271 = scalar_lea.vmem %s5, %s270
      %s272 = smul.u32 2, %s21
      %p273 = scmp.lt.s32.totalorder %s20, 1
      %s274 = scalar_select %p273, %s20, 1
      %p275 = scmp.lt.s32.totalorder %s272, 1
      %s276 = scalar_select %p275, %s272, 1
      %s277 = smul.addr %s276, 2
      %s278 = smul.addr %s274, 4
      %s279 = sadd.s32 %s277, %s278
      %s280 = smul.addr %s279, 4
      %s281 = scalar_lea.vmem %s0, %s280
      %s282 = smul.u32 2, %s21
      %s283 = smul.u32 2, %s21
      %p284 = scmp.lt.s32.totalorder %s20, 1
      %s285 = scalar_select %p284, %s20, 1
      %p286 = scmp.lt.s32.totalorder %s283, 1
      %s287 = scalar_select %p286, %s283, 1
      %s288 = smul.addr %s285, 2
      %s289 = sadd.s32 %s287, %s288
      %s290 = smul.addr %s289, 8
      %s291 = scalar_lea.vmem %s1, %s290
      %s292 = smul.u32 2, %s21
      %s293 = smul.u32 2, %s21
      %p294 = scmp.lt.s32.totalorder %s20, 1
      %s295 = scalar_select %p294, %s20, 1
      %p296 = scmp.lt.s32.totalorder %s293, 1
      %s297 = scalar_select %p296, %s293, 1
      %s298 = smul.addr %s295, 2
      %s299 = sadd.s32 %s297, %s298
      %s300 = smul.addr %s299, 8
      %s301 = scalar_lea.vmem %s5, %s300
      %s302 = smul.u32 2, %s21
      %v303 = vld [vmem:[%s281] sm:$0xff]
      %v304 = vld [vmem:[%s281 + $0x8] sm:$0xff]
      %v305 = vld [vmem:[%s2] sm:$0xf]
      %v306 = vld [vmem:[%s2 + $0x4] sm:$0xf]
      %v307 = vld [vmem:[%s2 + $0x8] sm:$0xf]
      %v308 = vld [vmem:[%s2 + $0xc] sm:$0xf]
      %v309 = vld [vmem:[%s2 + $0x10] sm:$0xf]
      %v310 = vld [vmem:[%s2 + $0x14] sm:$0xf]
      %v311 = vld [vmem:[%s2 + $0x18] sm:$0xf]
      %v312 = vld [vmem:[%s2 + $0x1c] sm:$0xf]
      %v313 = vld [vmem:[%s2 + $0x20] sm:$0xf]
      %v314 = vld [vmem:[%s2 + $0x24] sm:$0xf]
      %v315 = vld [vmem:[%s2 + $0x28] sm:$0xf]
      %v316 = vld [vmem:[%s2 + $0x2c] sm:$0xf]
      %v317 = vld [vmem:[%s2 + $0x30] sm:$0xf]
      %v318 = vld [vmem:[%s2 + $0x34] sm:$0xf]
      %v319 = vld [vmem:[%s2 + $0x38] sm:$0xf]
      %v320 = vld [vmem:[%s2 + $0x3c] sm:$0xf]
      %v321 = vld [vmem:[%s2 + $0x40] sm:$0xf]
      %v322 = vld [vmem:[%s2 + $0x44] sm:$0xf]
      %v323 = vld [vmem:[%s2 + $0x48] sm:$0xf]
      %v324 = vld [vmem:[%s2 + $0x4c] sm:$0xf]
      %v325 = vld [vmem:[%s2 + $0x50] sm:$0xf]
      %v326 = vld [vmem:[%s2 + $0x54] sm:$0xf]
      %v327 = vld [vmem:[%s2 + $0x58] sm:$0xf]
      %v328 = vld [vmem:[%s2 + $0x5c] sm:$0xf]
      %v329 = vld [vmem:[%s2 + $0x60] sm:$0xf]
      %v330 = vld [vmem:[%s2 + $0x64] sm:$0xf]
      %v331 = vld [vmem:[%s2 + $0x68] sm:$0xf]
      %v332 = vld [vmem:[%s2 + $0x6c] sm:$0xf]
      %v333 = vld [vmem:[%s2 + $0x70] sm:$0xf]
      %v334 = vld [vmem:[%s2 + $0x74] sm:$0xf]
      %v335 = vld [vmem:[%s2 + $0x78] sm:$0xf]
      %v336 = vld [vmem:[%s2 + $0x7c] sm:$0xf]
      %v339 = vunpack.c.l.b16 %v303
      %v340 = vunpack.c.h.b16 %v303
      %v341 = vunpack.c.l.b16 %v304
      %v342 = vunpack.c.h.b16 %v304
      %v343 = vpack.c.b16 %v341, %v339
      %v344 = vpack.c.b16 %v342, %v340
      %v379 = vunpack.c.l.b16 %v305
      %v380 = vunpack.c.l.b16 %v306
      %v381 = vunpack.c.l.b16 %v307
      %v382 = vunpack.c.l.b16 %v308
      %v383 = vunpack.c.l.b16 %v309
      %v384 = vunpack.c.l.b16 %v310
      %v385 = vunpack.c.l.b16 %v311
      %v386 = vunpack.c.l.b16 %v312
      %v387 = vunpack.c.l.b16 %v313
      %v388 = vunpack.c.l.b16 %v314
      %v389 = vunpack.c.l.b16 %v315
      %v390 = vunpack.c.l.b16 %v316
      %v391 = vunpack.c.l.b16 %v317
      %v392 = vunpack.c.l.b16 %v318
      %v393 = vunpack.c.l.b16 %v319
      %v394 = vunpack.c.l.b16 %v320
      %v395 = vunpack.c.l.b16 %v321
      %v396 = vunpack.c.l.b16 %v322
      %v397 = vunpack.c.l.b16 %v323
      %v398 = vunpack.c.l.b16 %v324
      %v399 = vunpack.c.l.b16 %v325
      %v400 = vunpack.c.l.b16 %v326
      %v401 = vunpack.c.l.b16 %v327
      %v402 = vunpack.c.l.b16 %v328
      %v403 = vunpack.c.l.b16 %v329
      %v404 = vunpack.c.l.b16 %v330
      %v405 = vunpack.c.l.b16 %v331
      %v406 = vunpack.c.l.b16 %v332
      %v407 = vunpack.c.l.b16 %v333
      %v408 = vunpack.c.l.b16 %v334
      %v409 = vunpack.c.l.b16 %v335
      %v410 = vunpack.c.l.b16 %v336
      %v411 = vpack.c.b16 %v380, %v379
      %v412 = vpack.c.b16 %v382, %v381
      %v413 = vpack.c.b16 %v384, %v383
      %v414 = vpack.c.b16 %v386, %v385
      %v415 = vpack.c.b16 %v388, %v387
      %v416 = vpack.c.b16 %v390, %v389
      %v417 = vpack.c.b16 %v392, %v391
      %v418 = vpack.c.b16 %v394, %v393
      %v419 = vpack.c.b16 %v396, %v395
      %v420 = vpack.c.b16 %v398, %v397
      %v421 = vpack.c.b16 %v400, %v399
      %v422 = vpack.c.b16 %v402, %v401
      %v423 = vpack.c.b16 %v404, %v403
      %v424 = vpack.c.b16 %v406, %v405
      %v425 = vpack.c.b16 %v408, %v407
      %v426 = vpack.c.b16 %v410, %v409
      %443 = vmatpush.bf16.msra.mxu0 %v418
      %444 = vmatpush.bf16.msra.mxu0 %v417
      %445 = vmatpush.bf16.msra.mxu0 %v416
      %446 = vmatpush.bf16.msra.mxu0 %v415
      %447 = vmatpush.bf16.msra.mxu0 %v414
      %448 = vmatpush.bf16.msra.mxu0 %v413
      %449 = vmatpush.bf16.msra.mxu0 %v412
      %450 = vmatpush.bf16.msra.mxu0 %v411
      %451 = vmatmul.bf16.gmra.mxu0 %v343
      %v452 = vpop.f32.mrf.mxu0
      %v453 = vadd.f32 0.0, %v452
      %v454 = vpop.f32.mrf.mxu0
      %v455 = vadd.f32 0.0, %v454
      %456 = vdwg.mxu0
      %457 = vmatpush.bf16.msra.mxu0 %v426
      %458 = vmatpush.bf16.msra.mxu0 %v425
      %459 = vmatpush.bf16.msra.mxu0 %v424
      %460 = vmatpush.bf16.msra.mxu0 %v423
      %461 = vmatpush.bf16.msra.mxu0 %v422
      %462 = vmatpush.bf16.msra.mxu0 %v421
      %463 = vmatpush.bf16.msra.mxu0 %v420
      %464 = vmatpush.bf16.msra.mxu0 %v419
      %465 = vmatmul.bf16.gmra.mxu0 %v344
      %v466 = vpop.f32.mrf.mxu0
      %v467 = vadd.f32 %v453, %v466
      %v468 = vpop.f32.mrf.mxu0
      %v469 = vadd.f32 %v455, %v468
      %470 = vdwg.mxu0
      %v471 = vld [vmem:[%s3] sm:$0x1]
      %v473 = vperm.slane %v471, 0
      %v475 = vmul.f32 %v467, %v473
      %v476 = vmul.f32 %v469, %v473
      %v477 = vld [vmem:[%s4] sm:$0x1]
      %v479 = vperm.slane %v477, 0
      %v481 = vadd.f32 %v475, %v479
      %v482 = vadd.f32 %v476, %v479
      %v483 = vld [vmem:[%s291] sm:$0xff]
      %v484 = vld [vmem:[%s291 + $0x8] sm:$0xff]
      %v485 = vadd.f32 %v481, %v483
      %v486 = vadd.f32 %v482, %v484
      %487 = vst [vmem:[%s301] sm:$0xff] %v485
      %488 = vst [vmem:[%s301 + $0x8] sm:$0xff] %v486
      %s489 = smul.u32 2, %s21
      %p490 = scmp.lt.s32.totalorder %s20, 1
      %s491 = scalar_select %p490, %s20, 1
      %p492 = scmp.lt.s32.totalorder %s489, 1
      %s493 = scalar_select %p492, %s489, 1
      %s494 = smul.addr %s491, 2
      %s495 = sadd.s32 %s493, %s494
      %s496 = smul.addr %s495, 8
      %s497 = scalar_lea.vmem %s5, %s496
      // Predicated region
      $region41: #{contextnet_residual.1} parent=39 // pred_check
        %p498 = pneg %p167
      $region42: #{contextnet_residual.1} parent=39 // pred_check_branch
        %500 = sbr.rel (%p498) target = $region44
      $region43: #{contextnet_residual.1} parent=39 // pred_region
        %s501 = smul.u32 2, %s21
      $region44: #{contextnet_residual.1} parent=39 // pred_fallthru
        _
    $region40: #{contextnet_residual.1} parent=5 // pred_fallthru
      _
    %p502 = scmp.le.s32.totalorder 2, %s11
    // Predicated region
    $region45: #{contextnet_residual.1} parent=5 // pred_check
      %p503 = pneg %p502
    $region46: #{contextnet_residual.1} parent=5 // pred_check_branch
      %505 = sbr.rel (%p503) target = $region48
    $region47: #{contextnet_residual.1} parent=5 // pred_region
      %s506 = ssub.s32 %s11, 2
      // Predicated region
      $region49: #{contextnet_residual.1} parent=47 // pred_check
        %p507 = pneg %p173
      $region50: #{contextnet_residual.1} parent=47 // pred_check_branch
        %509 = sbr.rel (%p507) target = $region52
      $region51: #{contextnet_residual.1} parent=47 // pred_region
        %s510 = smul.u32 2, %s23
        %p511 = scmp.lt.s32.totalorder %s22, 1
        %s512 = scalar_select %p511, %s22, 1
        %p513 = scmp.lt.s32.totalorder %s510, 1
        %s514 = scalar_select %p513, %s510, 1
        %s515 = smul.addr %s512, 2
        %s516 = sadd.s32 %s514, %s515
        %s517 = smul.addr %s516, 8
        %s518 = scalar_lea.vmem %s5, %s517
      $region52: #{contextnet_residual.1} parent=47 // pred_fallthru
        _
    $region48: #{contextnet_residual.1} parent=5 // pred_fallthru
      _
  $region6: #{contextnet_residual.1} parent=0 // loop_footer
    %s15 = sadd.s32 1, %s11
  $region7: #{contextnet_residual.1} parent=0 // loop_footer_branch
    %10 = sbr.rel target = $region3
  $region8: #{contextnet_residual.1} parent=0 // loop_exit
    _

</llo_original>
